<compile_context>
chip_gen: v7x
topology: tpu7x:2x2x1
jax: 0.10.0
libtpu: 0.0.40
codegen_flags: <defaults>
</compile_context>

<pallas_src>
import functools

import jax
import jax.numpy as jnp
from jax import lax
from jax.experimental import pallas as pl
from jax.experimental.pallas import tpu as pltpu

_LANES = 128
_SUBLANES = 8


def _focal_loss_kernel(w_ref, x_ref, y_ref, out_ref, acc_ref, *,
                       gamma, total_valid, block_rows, needs_mask):
    i = pl.program_id(1)

    @pl.when(i == 0)
    def _():
        acc_ref[...] = jnp.zeros_like(acc_ref)

    x = x_ref[...].astype(jnp.float32)          # (block_rows, 128)
    y = y_ref[...].astype(jnp.float32)          # (block_rows, 128)
    w = w_ref[...]                              # (1, 128) -> broadcasts

    # One exp per element, reused by both log1p and the sigmoid.
    e = jnp.exp(-jnp.abs(x))
    one_plus_e = 1.0 + e

    # Numerically-stable BCE with logits: max(x,0) - x*y + log1p(exp(-|x|)).
    bce = (jnp.maximum(x, 0.0) - x * y + jnp.log1p(e)) * w

    # 1 - sigmoid(x) = where(x>=0, e, 1) / (1 + e).
    # EUP approx reciprocal seed + one Newton step (VPU) ~= exact divide.
    inv = pl.reciprocal(one_plus_e, approx=True)
    inv = inv * (2.0 - one_plus_e * inv)
    one_minus_p = jnp.where(x >= 0.0, e, 1.0) * inv

    if gamma == 2.0:                             # static Python branch
        focal_scale = one_minus_p * one_minus_p
    else:
        focal_scale = one_minus_p ** gamma

    focal = focal_scale * bce

    if needs_mask:
        # Mask out the lane-dense padding exactly (padded BCE(0,0) != 0).
        row_base = (pl.program_id(0) * pl.num_programs(1) + i) * block_rows
        rows = lax.broadcasted_iota(jnp.int32, focal.shape, 0)
        lanes = lax.broadcasted_iota(jnp.int32, focal.shape, 1)
        flat_idx = (row_base + rows) * _LANES + lanes
        focal = jnp.where(flat_idx < total_valid, focal, 0.0)

    # Vector accumulate: fold the block into an (8,128) slab with vreg adds
    # (no per-step cross-lane XLU reduce, no scalar loop-carried chain).
    acc_ref[...] += jnp.sum(
        focal.reshape(block_rows // _SUBLANES, _SUBLANES, _LANES), axis=0)

    @pl.when(i == pl.num_programs(1) - 1)
    def _():
        out_ref[0, :, :] = acc_ref[...]


def focal_loss(logits, labels, class_weights, gamma=2.0, *,
               max_block_rows=1024, num_cores=2):
    """Scalar focal loss, numerically matching the PyTorch module."""
    N, C = logits.shape
    assert labels.shape == (N, C)
    assert class_weights.shape == (C,)
    assert _LANES % C == 0, "lane-dense repack requires 128 % num_classes == 0"

    total = N * C
    rows = -(-total // _LANES)                              # cdiv(total, 128)

    per_core_rows = -(-rows // num_cores)
    block_rows = min(
        max_block_rows,
        max(_SUBLANES,
            ((per_core_rows + _SUBLANES - 1) // _SUBLANES) * _SUBLANES))
    n_inner = max(1, -(-per_core_rows // block_rows))
    padded_rows = num_cores * n_inner * block_rows
    pad = padded_rows * _LANES - total
    needs_mask = pad > 0

    flat_x = logits.reshape(-1)
    flat_y = labels.reshape(-1)
    if pad:
        flat_x = jnp.pad(flat_x, (0, pad))
        flat_y = jnp.pad(flat_y, (0, pad))
    x2 = flat_x.reshape(padded_rows, _LANES)
    y2 = flat_y.reshape(padded_rows, _LANES)

    # Lane j of the flattened layout always holds class (j % C), so the weight
    # row is just the weight vector tiled across the 128 lanes.
    w_row = jnp.tile(class_weights.astype(jnp.float32),
                     _LANES // C).reshape(1, _LANES)

    def _in_map(c, i):
        return (c * n_inner + i, 0)

    kernel = functools.partial(
        _focal_loss_kernel,
        gamma=float(gamma),
        total_valid=int(total),
        block_rows=int(block_rows),
        needs_mask=bool(needs_mask),
    )

    partials = pl.pallas_call(
        kernel,
        out_shape=jax.ShapeDtypeStruct((num_cores, _SUBLANES, _LANES),
                                       jnp.float32),
        grid_spec=pltpu.PrefetchScalarGridSpec(
            num_scalar_prefetch=0,
            grid=(num_cores, n_inner),
            in_specs=[
                pl.BlockSpec((1, _LANES), lambda c, i: (0, 0)),      # weights
                pl.BlockSpec((block_rows, _LANES), _in_map),         # logits
                pl.BlockSpec((block_rows, _LANES), _in_map),         # labels
            ],
            out_specs=pl.BlockSpec((1, _SUBLANES, _LANES),
                                   lambda c, i: (c, 0, 0)),
            scratch_shapes=[pltpu.VMEM((_SUBLANES, _LANES), jnp.float32)],
        ),
        compiler_params=pltpu.CompilerParams(
            dimension_semantics=("parallel", "arbitrary")),
    )(w_row, x2, y2)

    # Single cross-lane reduction + mean normalization, done once outside.
    return jnp.sum(partials) / total


def _focal_loss_ref(logits, labels, class_weights, gamma=2.0):
    x = logits.astype(jnp.float32)
    y = labels.astype(jnp.float32)
    bce = jnp.maximum(x, 0.0) - x * y + jnp.log1p(jnp.exp(-jnp.abs(x)))
    bce = bce * class_weights[None, :]
    probs = jax.nn.sigmoid(x)
    return jnp.mean(((1.0 - probs) ** gamma) * bce)


if __name__ == "__main__":
    key = jax.random.PRNGKey(0)
    k1, k2 = jax.random.split(key)

    N, C = 16, 8  # small batch, 8 classes (matches the module's class_weights)
    logits = jax.random.normal(k1, (N, C), dtype=jnp.float32) * 2.0
    labels = jax.random.bernoulli(k2, 0.3, (N, C)).astype(jnp.float32)

    # Deterministic parameters from the module's __init__:
    class_weights = jnp.array(
        [2.2232, 0.9754, 1.7378, 2.1744, 0.2868, 1.5779, 1.2469, 1.7619],
        dtype=jnp.float32)
    gamma = 2.0

    loss = focal_loss(logits, labels, class_weights, gamma)
    loss = jax.block_until_ready(loss)

    ref = _focal_loss_ref(logits, labels, class_weights, gamma)
    assert jnp.allclose(loss, ref, rtol=1e-4, atol=1e-6), (loss, ref)

    print("KERNEL_OK")
</pallas_src>

<mosaic_0001>
module attributes {stable_mosaic.version = 11 : i64} {
  func.func @_focal_loss_kernel(%arg0: i32, %arg1: i32, %arg2: memref<1x128xf32, #tpu.memory_space<vmem>>, %arg3: memref<8x128xf32, #tpu.memory_space<vmem>>, %arg4: memref<8x128xf32, #tpu.memory_space<vmem>>, %arg5: memref<1x8x128xf32, #tpu.memory_space<vmem>>, %arg6: memref<8x128xf32, #tpu.memory_space<vmem>>) attributes {dimension_semantics = [#tpu.dimension_semantics<parallel>, #tpu.dimension_semantics<arbitrary>], iteration_bounds = array<i64: 2, 1>, scalar_prefetch = 0 : i64, scratch_operands = 1 : i64, tpu.core_type = #tpu.core_type<tc>, window_params = [{pipeline_mode = #tpu.pipeline_mode<synchronous>, transform_indices = @transform_0, window_bounds = array<i64: 1, 128>}, {transform_indices = @transform_1, window_bounds = array<i64: 8, 128>}, {transform_indices = @transform_2, window_bounds = array<i64: 8, 128>}, {transform_indices = @transform_3, window_bounds = array<i64: 1, 8, 128>}]} {
    %c0_i32 = arith.constant 0 : i32
    %0 = arith.cmpi eq, %arg1, %c0_i32 : i32
    %1 = arith.extui %0 : i1 to i32
    %c0_i32_0 = arith.constant 0 : i32
    %2 = arith.cmpi ne, %1, %c0_i32_0 : i32
    scf.if %2 {
      %cst_20 = arith.constant 0.000000e+00 : f32
      %54 = vector.broadcast %cst_20 : f32 to vector<8x128xf32>
      %c0_21 = arith.constant 0 : index
      %c0_22 = arith.constant 0 : index
      %55 = vector.load %arg6[%c0_21, %c0_22] : memref<8x128xf32, #tpu.memory_space<vmem>>, vector<8x128xf32>
      tpu.vector_store %arg6[%c0_21, %c0_22], %54 {strides = array<i32>} : memref<8x128xf32, #tpu.memory_space<vmem>>, vector<8x128xf32>,
    } else {
    }
    %c0 = arith.constant 0 : index
    %c0_1 = arith.constant 0 : index
    %3 = vector.load %arg3[%c0, %c0_1] : memref<8x128xf32, #tpu.memory_space<vmem>>, vector<8x128xf32>
    %c0_2 = arith.constant 0 : index
    %c0_3 = arith.constant 0 : index
    %4 = vector.load %arg4[%c0_2, %c0_3] : memref<8x128xf32, #tpu.memory_space<vmem>>, vector<8x128xf32>
    %c0_4 = arith.constant 0 : index
    %c0_5 = arith.constant 0 : index
    %5 = vector.load %arg2[%c0_4, %c0_5] : memref<1x128xf32, #tpu.memory_space<vmem>>, vector<1x128xf32>
    %6 = math.absf %3 : vector<8x128xf32>
    %cst = arith.constant 0.000000e+00 : f32
    %7 = vector.broadcast %cst : f32 to vector<8x128xf32>
    %8 = arith.subf %7, %6 : vector<8x128xf32>
    %9 = math.exp %8 : vector<8x128xf32>
    %cst_6 = arith.constant 1.000000e+00 : f32
    %10 = vector.broadcast %cst_6 : f32 to vector<8x128xf32>
    %11 = arith.addf %10, %9 : vector<8x128xf32>
    %cst_7 = arith.constant 0.000000e+00 : f32
    %12 = vector.broadcast %cst_7 : f32 to vector<8x128xf32>
    %13 = arith.maximumf %3, %12 : vector<8x128xf32>
    %14 = arith.mulf %3, %4 : vector<8x128xf32>
    %15 = arith.subf %13, %14 : vector<8x128xf32>
    %16 = math.log1p %9 : vector<8x128xf32>
    %17 = arith.addf %15, %16 : vector<8x128xf32>
    %18 = vector.broadcast %5 : vector<1x128xf32> to vector<8x128xf32>
    %19 = arith.mulf %17, %18 : vector<8x128xf32>
    %20 = tpu.reciprocal %11 {approx = true} : vector<8x128xf32> -> vector<8x128xf32>
    %21 = arith.mulf %11, %20 : vector<8x128xf32>
    %cst_8 = arith.constant 2.000000e+00 : f32
    %22 = vector.broadcast %cst_8 : f32 to vector<8x128xf32>
    %23 = arith.subf %22, %21 : vector<8x128xf32>
    %24 = arith.mulf %20, %23 : vector<8x128xf32>
    %cst_9 = arith.constant 0.000000e+00 : f32
    %25 = vector.broadcast %cst_9 : f32 to vector<8x128xf32>
    %26 = arith.cmpf oge, %3, %25 : vector<8x128xf32>
    %cst_10 = arith.constant 1.000000e+00 : f32
    %27 = vector.broadcast %cst_10 : f32 to vector<8x128xf32>
    %28 = arith.select %26, %9, %27 : vector<8x128xi1>, vector<8x128xf32>
    %29 = arith.mulf %28, %24 : vector<8x128xf32>
    %30 = arith.mulf %29, %29 : vector<8x128xf32>
    %31 = arith.mulf %30, %19 : vector<8x128xf32>
    %c1_i32 = arith.constant 1 : i32
    %32 = arith.muli %arg0, %c1_i32 : i32
    %33 = arith.addi %32, %arg1 : i32
    %c8_i32 = arith.constant 8 : i32
    %34 = arith.muli %33, %c8_i32 : i32
    %35 = tpu.iota {dimensions = array<i32: 0>} : vector<8x128xi32>
    %36 = tpu.iota {dimensions = array<i32: 1>} : vector<8x128xi32>
    %37 = vector.broadcast %34 : i32 to vector<8x128xi32>
    %38 = arith.addi %37, %35 : vector<8x128xi32>
    %c128_i32 = arith.constant 128 : i32
    %39 = vector.broadcast %c128_i32 : i32 to vector<8x128xi32>
    %40 = arith.muli %38, %39 : vector<8x128xi32>
    %41 = arith.addi %40, %36 : vector<8x128xi32>
    %c128_i32_11 = arith.constant 128 : i32
    %42 = vector.broadcast %c128_i32_11 : i32 to vector<8x128xi32>
    %43 = arith.cmpi slt, %41, %42 : vector<8x128xi32>
    %cst_12 = arith.constant 0.000000e+00 : f32
    %44 = vector.broadcast %cst_12 : f32 to vector<8x128xf32>
    %45 = arith.select %43, %31, %44 : vector<8x128xi1>, vector<8x128xf32>
    %c0_13 = arith.constant 0 : index
    %c0_14 = arith.constant 0 : index
    %46 = vector.load %arg6[%c0_13, %c0_14] : memref<8x128xf32, #tpu.memory_space<vmem>>, vector<8x128xf32>
    %47 = vector.shape_cast %45 : vector<8x128xf32> to vector<1x8x128xf32>
    %cst_15 = arith.constant dense<0.000000e+00> : vector<8x128xf32>
    %48 = vector.multi_reduction <add>, %47, %cst_15 [0] : vector<1x8x128xf32> to vector<8x128xf32>
    %49 = arith.addf %46, %48 : vector<8x128xf32>
    %c0_16 = arith.constant 0 : index
    %c0_17 = arith.constant 0 : index
    %50 = vector.load %arg6[%c0_16, %c0_17] : memref<8x128xf32, #tpu.memory_space<vmem>>, vector<8x128xf32>
    tpu.vector_store %arg6[%c0_16, %c0_17], %49 {strides = array<i32>} : memref<8x128xf32, #tpu.memory_space<vmem>>, vector<8x128xf32>,
    %c0_i32_18 = arith.constant 0 : i32
    %51 = arith.cmpi eq, %arg1, %c0_i32_18 : i32
    %52 = arith.extui %51 : i1 to i32
    %c0_i32_19 = arith.constant 0 : i32
    %53 = arith.cmpi ne, %52, %c0_i32_19 : i32
    scf.if %53 {
      %c0_20 = arith.constant 0 : index
      %c0_21 = arith.constant 0 : index
      %54 = vector.load %arg6[%c0_20, %c0_21] : memref<8x128xf32, #tpu.memory_space<vmem>>, vector<8x128xf32>
      %c0_22 = arith.constant 0 : index
      %c0_23 = arith.constant 0 : index
      %c0_24 = arith.constant 0 : index
      %55 = vector.load %arg5[%c0_22, %c0_23, %c0_24] : memref<1x8x128xf32, #tpu.memory_space<vmem>>, vector<1x8x128xf32>
      %56 = vector.shape_cast %55 : vector<1x8x128xf32> to vector<8x128xf32>
      %57 = vector.shape_cast %54 : vector<8x128xf32> to vector<1x8x128xf32>
      tpu.vector_store %arg5[%c0_22, %c0_23, %c0_24], %57 {strides = array<i32>} : memref<1x8x128xf32, #tpu.memory_space<vmem>>, vector<1x8x128xf32>,
    } else {
    }
    return
  }
  func.func @transform_0(%arg0: i32, %arg1: i32) -> (i32, i32) {
    %c0_i32 = arith.constant 0 : i32
    %c0_i32_0 = arith.constant 0 : i32
    %c0_i32_1 = arith.constant 0 : i32
    return %c0_i32, %c0_i32_0 : i32, i32
  }
  func.func @transform_1(%arg0: i32, %arg1: i32) -> (i32, i32) {
    %c1_i32 = arith.constant 1 : i32
    %0 = arith.muli %arg0, %c1_i32 : i32
    %1 = arith.addi %0, %arg1 : i32
    %c0_i32 = arith.constant 0 : i32
    %c0_i32_0 = arith.constant 0 : i32
    return %1, %c0_i32 : i32, i32
  }
  func.func @transform_2(%arg0: i32, %arg1: i32) -> (i32, i32) {
    %c1_i32 = arith.constant 1 : i32
    %0 = arith.muli %arg0, %c1_i32 : i32
    %1 = arith.addi %0, %arg1 : i32
    %c0_i32 = arith.constant 0 : i32
    %c0_i32_0 = arith.constant 0 : i32
    return %1, %c0_i32 : i32, i32
  }
  func.func @transform_3(%arg0: i32, %arg1: i32) -> (i32, i32, i32) {
    %c0_i32 = arith.constant 0 : i32
    %c0_i32_0 = arith.constant 0 : i32
    %c0_i32_1 = arith.constant 0 : i32
    return %arg0, %c0_i32, %c0_i32_0 : i32, i32, i32
  }
}

</mosaic_0001>

<llo_original>
// kernel: tpu_custom_call.1
$region0: #{tpu_custom_call.1}
  #allocation0 [shape = 'u32[]', space=smem, size = 0x4, offset = 0x4, fixed_abs, tag = 'smem constant byte address 0x4 - core index']
  #allocation1 [shape = 'u32[144,128]{1,0:T(1,128)}', space=vmem, size = 0x12000, scoped, tag = 'internal scratch']
  #allocation2 [shape = 'f32[8,128]{1,0:T(8,128)}', space=vmem, size = 0x1000, scoped, tag = 'scratch operand']
  %s0 = inlined_call_operand.hbm [shape: f32[1,128], index: 0, kind: input, shape index: {}]
  %s1 = inlined_call_operand.hbm [shape: f32[16,128], index: 1, kind: input, shape index: {}]
  %s2 = inlined_call_operand.hbm [shape: f32[16,128], index: 2, kind: input, shape index: {}]
  %s3 = inlined_call_operand.hbm [shape: f32[2,8,128], index: 3, kind: output, shape index: {}]
  %s4 = sld [smem:[#allocation0]]
  $region65: #{tpu_custom_call.1} parent=0
    _
  %s6 = ssub.s32 1, %s4
  %s7 = scalar_select 0, %s6, %s4
  $region1: #{tpu_custom_call.1} parent=0
    #allocation3 [shape = 'u8[512]{0}', space=vmem, size = 0x400, scoped, tag = 'input window, operand 0, single buffered']
    #allocation4 [shape = 's32[2]{0}', space=sflag, size = 0x8, scoped, tag = 'scoped memory for tpu_custom_call.1']
    #allocation5 [shape = 's32[2]{0}', space=sflag, size = 0x8, scoped, tag = 'scoped memory for tpu_custom_call.1']
    #allocation6 [shape = 'u8[8192]{0}', space=vmem, size = 0x2000, scoped, tag = 'input window, operand 1']
    #allocation7 [shape = 's32[2]{0}', space=sflag, size = 0x8, scoped, tag = 'scoped memory for tpu_custom_call.1']
    #allocation8 [shape = 'u8[8192]{0}', space=vmem, size = 0x2000, scoped, tag = 'input window, operand 2']
    #allocation9 [shape = 'u8[8192]{0}', space=vmem, size = 0x2000, scoped, tag = 'output window, operand 0']
    %8 = vsyncpa [#allocation4], 0
    %9 = vsyncpa [#allocation7], 0
    %s10 = scalar_lea.sflag [#allocation7], 1
    %11 = vsyncpa %s10, 0
    %12 = vsyncpa [#allocation5], 0
    %s13 = scalar_lea.sflag [#allocation5], 1
    %14 = vsyncpa %s13, 0
    loop: start=0, step=1, limit=4
    $region2: #{tpu_custom_call.1} parent=1 // loop_pre_header
      _
    $region3: #{tpu_custom_call.1} parent=1 // loop_header
      %s16 = sphi 0, %s20
      %p17 = scmp.ge.s32.totalorder %s16, 4
      %s23 = sphi 0, %s35
      %s24 = sphi 0, %s31
      %s25 = sphi 0, %s23
      %s26 = sphi 0, %s24
      %s27 = sphi 0, %s25
      %s28 = sphi 0, %s26
      %s36 = sphi 0, %s36
      %s38 = sphi 0, %s36
      %s39 = sphi 0, %s38
      %s53 = sphi 0, %s39
      %s61 = sphi 0, %s63
      %s64 = sphi 0, %s61
      %s65 = sphi 0, %s64
      %s81 = sphi 0, %s65
      %s89 = sphi 0, %s91
      %s92 = sphi 0, %s89
      %s93 = sphi 0, %s92
      %s109 = sphi 0, %s93
      %s115 = sphi 0, %s117
      %s118 = sphi 0, %s115
      %s119 = sphi 0, %s118
      %s135 = sphi 0, %s119
    $region4: #{tpu_custom_call.1} parent=1 // loop_header_branch
      %19 = sbr.rel (%p17) target = $region8
    $region5: #{tpu_custom_call.1} parent=1 // loop_body
      %s21 = ssub.s32 %s16, 1
      %s22 = ssub.s32 %s16, 2
      %s29 = sadd.s32 1, %s24
      %p30 = scmp.ge.s32.totalorder %s29, 1
      %s31 = scalar_select %p30, 0, %s29
      %s32 = sadd.s32 1, %s23
      %s33 = scalar_select %p30, %s32, %s23
      %p34 = scmp.ge.s32.totalorder %s33, 2
      %s35 = scalar_select %p34, 0, %s33
      %s37 = sadd.s32 %s36, 1
      %p40 = scmp.eq.s32.totalorder %s16, 1
      %p41 = scmp.ne.s32.totalorder %s36, %s38
      %p42 = scmp.eq.s32.totalorder %s16, 0
      %p43 = por %p41, %p42
      %p44 = scmp.ne.s32.totalorder %s36, %s38
      %p45 = scmp.eq.s32.totalorder %s21, 1
      %p46 = por %p44, %p45
      %p47 = scmp.ne.s32.totalorder %s38, %s39
      %p48 = scmp.eq.s32.totalorder %s21, 0
      %p49 = por %p47, %p48
      %p50 = scmp.ne.s32.totalorder %s38, %s39
      %p51 = scmp.eq.s32.totalorder %s22, 1
      %p52 = por %p50, %p51
      %p54 = scmp.ne.s32.totalorder %s39, %s53
      %p55 = scmp.eq.s32.totalorder %s22, 0
      %p56 = por %p54, %p55
      %s57 = sadd.s32 %s23, %s24
      %s58 = sadd.s32 %s35, %s31
      %s59 = ssub.s32 %s57, %s58
      %p60 = scmp.eq.s32.totalorder %s59, 0
      %s62 = sadd.s32 %s61, 1
      %s63 = scalar_select %p60, %s61, %s62
      %p66 = pneg %p60
      %p67 = scmp.eq.s32.totalorder %s16, 1
      %p68 = por %p66, %p67
      %p69 = scmp.ne.s32.totalorder %s61, %s64
      %p70 = scmp.eq.s32.totalorder %s16, 0
      %p71 = por %p69, %p70
      %p72 = scmp.ne.s32.totalorder %s61, %s64
      %p73 = scmp.eq.s32.totalorder %s21, 1
      %p74 = por %p72, %p73
      %p75 = scmp.ne.s32.totalorder %s64, %s65
      %p76 = scmp.eq.s32.totalorder %s21, 0
      %p77 = por %p75, %p76
      %p78 = scmp.ne.s32.totalorder %s64, %s65
      %p79 = scmp.eq.s32.totalorder %s22, 1
      %p80 = por %p78, %p79
      %p82 = scmp.ne.s32.totalorder %s65, %s81
      %p83 = scmp.eq.s32.totalorder %s22, 0
      %p84 = por %p82, %p83
      %s85 = sadd.s32 %s23, %s24
      %s86 = sadd.s32 %s35, %s31
      %s87 = ssub.s32 %s85, %s86
      %p88 = scmp.eq.s32.totalorder %s87, 0
      %s90 = sadd.s32 %s89, 1
      %s91 = scalar_select %p88, %s89, %s90
      %p94 = pneg %p88
      %p95 = scmp.eq.s32.totalorder %s16, 1
      %p96 = por %p94, %p95
      %p97 = scmp.ne.s32.totalorder %s89, %s92
      %p98 = scmp.eq.s32.totalorder %s16, 0
      %p99 = por %p97, %p98
      %p100 = scmp.ne.s32.totalorder %s89, %s92
      %p101 = scmp.eq.s32.totalorder %s21, 1
      %p102 = por %p100, %p101
      %p103 = scmp.ne.s32.totalorder %s92, %s93
      %p104 = scmp.eq.s32.totalorder %s21, 0
      %p105 = por %p103, %p104
      %p106 = scmp.ne.s32.totalorder %s92, %s93
      %p107 = scmp.eq.s32.totalorder %s22, 1
      %p108 = por %p106, %p107
      %p110 = scmp.ne.s32.totalorder %s93, %s109
      %p111 = scmp.eq.s32.totalorder %s22, 0
      %p112 = por %p110, %p111
      %s113 = ssub.s32 %s23, %s35
      %p114 = scmp.eq.s32.totalorder %s113, 0
      %s116 = sadd.s32 %s115, 1
      %s117 = scalar_select %p114, %s115, %s116
      %p120 = pneg %p114
      %p121 = scmp.eq.s32.totalorder %s16, 1
      %p122 = por %p120, %p121
      %p123 = scmp.ne.s32.totalorder %s115, %s118
      %p124 = scmp.eq.s32.totalorder %s16, 0
      %p125 = por %p123, %p124
      %p126 = scmp.ne.s32.totalorder %s115, %s118
      %p127 = scmp.eq.s32.totalorder %s21, 1
      %p128 = por %p126, %p127
      %p129 = scmp.ne.s32.totalorder %s118, %s119
      %p130 = scmp.eq.s32.totalorder %s21, 0
      %p131 = por %p129, %p130
      %p132 = scmp.ne.s32.totalorder %s118, %s119
      %p133 = scmp.eq.s32.totalorder %s22, 1
      %p134 = por %p132, %p133
      %p136 = scmp.ne.s32.totalorder %s119, %s135
      %p137 = scmp.eq.s32.totalorder %s22, 0
      %p138 = por %p136, %p137
      %p139 = scmp.le.s32.totalorder 1, %s16
      %p140 = scmp.lt.s32.totalorder %s16, 3
      %p141 = pnand %p139, %p140
      %p142 = pneg %p141
      // Predicated region
      $region9: #{tpu_custom_call.1} parent=5 // pred_check
        _
      $region10: #{tpu_custom_call.1} parent=5 // pred_check_branch
        %144 = sbr.rel (%p141) target = $region12
      $region11: #{tpu_custom_call.1} parent=5 // pred_region
        %s145 = ssub.s32 %s16, 1
        // Predicated region
        $region13: #{tpu_custom_call.1} parent=11 // pred_check
          %p146 = pneg %p49
        $region14: #{tpu_custom_call.1} parent=11 // pred_check_branch
          %148 = sbr.rel (%p146) target = $region16
        $region15: #{tpu_custom_call.1} parent=11 // pred_region
          %s150 = ssub.s32 16, 16
          %151 = vsyncadd [#allocation4], %s150
          %s153 = sshll.u32 [#allocation3], 4
          %s154 = int_to_ptr.vmem [resolvable:$true] %s153
          %156 = dma.hbm_to_vmem [thread:$0]  %s0, 16, %s154, [#allocation4]
        $region16: #{tpu_custom_call.1} parent=11 // pred_fallthru
          _
      $region12: #{tpu_custom_call.1} parent=5 // pred_fallthru
        _
      %p157 = scmp.lt.s32.totalorder %s16, 2
      // Predicated region
      $region17: #{tpu_custom_call.1} parent=5 // pred_check
        %p158 = pneg %p157
      $region18: #{tpu_custom_call.1} parent=5 // pred_check_branch
        %160 = sbr.rel (%p158) target = $region20
      $region19: #{tpu_custom_call.1} parent=5 // pred_region
        // Predicated region
        $region21: #{tpu_custom_call.1} parent=19 // pred_check
          %p161 = pneg %p71
        $region22: #{tpu_custom_call.1} parent=19 // pred_check_branch
          %163 = sbr.rel (%p161) target = $region24
        $region23: #{tpu_custom_call.1} parent=19 // pred_region
          %s164 = sand.u32 %s16, 1
          %s165 = scalar_lea.sflag [#allocation7], %s164
          %s166 = sand.u32 %s61, 1
          %s167 = smul.addr %s166, 8
          %s168 = scalar_lea.vmem [#allocation6], %s167
          %s169 = sadd.s32 %s23, %s24
          %s171 = ssub.s32 128, 128
          %172 = vsyncadd %s165, %s171
          %s173 = smul.addr %s169, 128
          %s174 = scalar_lea.hbm %s1, %s173
          %s176 = sshll.u32 %s168, 4
          %s177 = int_to_ptr.vmem [resolvable:$true] %s176
          %179 = dma.hbm_to_vmem [thread:$0]  %s174, 128, %s177, %s165
        $region24: #{tpu_custom_call.1} parent=19 // pred_fallthru
          _
        // Predicated region
        $region25: #{tpu_custom_call.1} parent=19 // pred_check
          %p180 = pneg %p99
        $region26: #{tpu_custom_call.1} parent=19 // pred_check_branch
          %182 = sbr.rel (%p180) target = $region28
        $region27: #{tpu_custom_call.1} parent=19 // pred_region
          %s183 = sand.u32 %s16, 1
          %s184 = scalar_lea.sflag [#allocation7], %s183
          %s185 = sand.u32 %s89, 1
          %s186 = smul.addr %s185, 8
          %s187 = scalar_lea.vmem [#allocation8], %s186
          %s188 = sadd.s32 %s23, %s24
          %s190 = ssub.s32 128, 128
          %191 = vsyncadd %s184, %s190
          %s192 = smul.addr %s188, 128
          %s193 = scalar_lea.hbm %s2, %s192
          %s195 = sshll.u32 %s187, 4
          %s196 = int_to_ptr.vmem [resolvable:$true] %s195
          %198 = dma.hbm_to_vmem [thread:$0]  %s193, 128, %s196, %s184
        $region28: #{tpu_custom_call.1} parent=19 // pred_fallthru
          _
      $region20: #{tpu_custom_call.1} parent=5 // pred_fallthru
        _
      %p199 = scmp.le.s32.totalorder 1, %s16
      %p200 = scmp.lt.s32.totalorder %s16, 3
      %p201 = pnand %p199, %p200
      %p202 = pneg %p201
      // Predicated region
      $region29: #{tpu_custom_call.1} parent=5 // pred_check
        _
      $region30: #{tpu_custom_call.1} parent=5 // pred_check_branch
        %204 = sbr.rel (%p201) target = $region32
      $region31: #{tpu_custom_call.1} parent=5 // pred_region
        %s205 = ssub.s32 %s16, 1
        // Predicated region
        $region33: #{tpu_custom_call.1} parent=31 // pred_check
          %p206 = pneg %p49
        $region34: #{tpu_custom_call.1} parent=31 // pred_check_branch
          %208 = sbr.rel (%p206) target = $region36
        $region35: #{tpu_custom_call.1} parent=31 // pred_region
          %209 = dma.done [#allocation4], 16
        $region36: #{tpu_custom_call.1} parent=31 // pred_fallthru
          _
        %s210 = sand.u32 %s21, 1
        %s211 = scalar_lea.sflag [#allocation7], %s210
        %s212 = sand.u32 %s64, 1
        %s213 = smul.addr %s212, 8
        %s214 = scalar_lea.vmem [#allocation6], %s213
        // Predicated region
        $region37: #{tpu_custom_call.1} parent=31 // pred_check
          %p215 = pneg %p77
        $region38: #{tpu_custom_call.1} parent=31 // pred_check_branch
          %217 = sbr.rel (%p215) target = $region40
        $region39: #{tpu_custom_call.1} parent=31 // pred_region
          %218 = dma.done %s211, 128
        $region40: #{tpu_custom_call.1} parent=31 // pred_fallthru
          _
        %s219 = sand.u32 %s21, 1
        %s220 = scalar_lea.sflag [#allocation7], %s219
        %s221 = sand.u32 %s92, 1
        %s222 = smul.addr %s221, 8
        %s223 = scalar_lea.vmem [#allocation8], %s222
        // Predicated region
        $region41: #{tpu_custom_call.1} parent=31 // pred_check
          %p224 = pneg %p105
        $region42: #{tpu_custom_call.1} parent=31 // pred_check_branch
          %226 = sbr.rel (%p224) target = $region44
        $region43: #{tpu_custom_call.1} parent=31 // pred_region
          %227 = dma.done %s220, 128
        $region44: #{tpu_custom_call.1} parent=31 // pred_fallthru
          _
        %p228 = pneg %p49
        %p229 = pneg %p46
        %s230 = sand.u32 %s21, 1
        %s231 = scalar_lea.sflag [#allocation7], %s230
        %s232 = sand.u32 %s64, 1
        %s233 = smul.addr %s232, 8
        %s234 = scalar_lea.vmem [#allocation6], %s233
        %p235 = pneg %p77
        %p236 = pneg %p74
        %s237 = sand.u32 %s21, 1
        %s238 = scalar_lea.sflag [#allocation7], %s237
        %s239 = sand.u32 %s92, 1
        %s240 = smul.addr %s239, 8
        %s241 = scalar_lea.vmem [#allocation8], %s240
        %p242 = pneg %p105
        %p243 = pneg %p102
        %p244 = pneg %p131
        %p245 = pneg %p128
        %s246 = sand.u32 %s118, 1
        %s247 = scalar_lea.sflag [#allocation5], %s246
        %s248 = sand.u32 %s118, 1
        %s249 = smul.addr %s248, 8
        %s250 = scalar_lea.vmem [#allocation9], %s249
        %s251 = sadd.s32 %s25, %s26
        %s252 = sadd.s32 %s25, %s26
        %p253 = scmp.eq.s32.totalorder %s26, 0
        // Predicated region
        $region45: #{tpu_custom_call.1} parent=31 // pred_check
          %p254 = pneg %p253
        $region46: #{tpu_custom_call.1} parent=31 // pred_check_branch
          %256 = sbr.rel (%p254) target = $region48
        $region47: #{tpu_custom_call.1} parent=31 // pred_region
          %257 = vst [vmem:[#allocation2] sm:$0xff] 0.0
        $region48: #{tpu_custom_call.1} parent=31 // pred_fallthru
          _
        %v258 = vld [vmem:[%s214] sm:$0xff]
        %v259 = vld [vmem:[%s223] sm:$0xff]
        %v260 = vld [vmem:[#allocation3] sm:$0x1]
        %v261 = vand.u32 2147483647, %v258
        %v262 = vsub.f32 0.0, %v261
        %v263 = vmul.f32 %v262, 1.442695
        %v264 = vpow.pop %v263
        %v265 = vadd.f32 %v264, 1.0
        %v266 = vmax.f32 %v258, 0.0
        %v267 = vmul.f32 %v258, %v259
        %v268 = vsub.f32 %v266, %v267
        %v269 = vadd.f32 %v264, 1.0
        %v270 = vlog2.pop %v269
        %v271 = vmul.f32 %v270, 0.6931472
        %v272 = vmul.f32 -0.5, %v264
        %v273 = vadd.f32 %v272, 1.0
        %v274 = vmul.f32 %v273, %v264
        %v275 = vand.u32 2147483647, %v264
        %vm276 = vcmp.lt.f32.partialorder %v275, 0.0004427343
        %v277 = vsel %vm276, %v274, %v271
        %v278 = vadd.f32 %v268, %v277
        %v280 = vlaneseq
        %v281 = vshrl.u32 %v280, 7
        %v282 = vsub.s32 0, %v281
        %v283 = vrot.slane %v260, %v282
        %v285 = vmul.f32 %v278, %v283
        %v286 = vrcp.pop %v265
        %v287 = vmul.f32 %v265, %v286
        %v288 = vsub.f32 2.0, %v287
        %v289 = vmul.f32 %v286, %v288
        %vm290 = vcmp.ge.f32.partialorder %v258, 0.0
        %v291 = vsel %vm290, %v264, 1.0
        %v292 = vmul.f32 %v291, %v289
        %v293 = vmul.f32 %v292, %v292
        %v294 = vmul.f32 %v293, %v285
        %s295 = sadd.s32 %s25, %s26
        %s296 = smul.u32 %s295, 8
        %v297 = vlaneseq
        %v298 = vshrl.u32 %v297, 7
        %v299 = vlaneseq
        %v300 = vand.u32 %v299, 127
        %v301 = vstv %s296
        %v302 = vadd.s32 %v301, %v298
        %v303 = vmul.u32 %v302, 128
        %v304 = vadd.s32 %v303, %v300
        %vm305 = vcmp.lt.s32.totalorder %v304, 128
        %v306 = vsel %vm305, %v294, 0.0
        %v307 = vld [vmem:[#allocation2] sm:$0xff]
        %v308 = vadd.f32 %v306, 0.0
        %v309 = vadd.f32 %v307, %v308
        %310 = vst [vmem:[#allocation2] sm:$0xff] %v309
        // Predicated region
        $region49: #{tpu_custom_call.1} parent=31 // pred_check
          %p311 = pneg %p253
        $region50: #{tpu_custom_call.1} parent=31 // pred_check_branch
          %313 = sbr.rel (%p311) target = $region52
        $region51: #{tpu_custom_call.1} parent=31 // pred_region
          %v314 = vld [vmem:[#allocation2] sm:$0xff]
          %315 = vst [vmem:[%s250] sm:$0xff] %v314
        $region52: #{tpu_custom_call.1} parent=31 // pred_fallthru
          _
        %s316 = sand.u32 %s118, 1
        %s317 = scalar_lea.sflag [#allocation5], %s316
        %s318 = sand.u32 %s118, 1
        %s319 = smul.addr %s318, 8
        %s320 = scalar_lea.vmem [#allocation9], %s319
        // Predicated region
        $region53: #{tpu_custom_call.1} parent=31 // pred_check
          %p321 = pneg %p128
        $region54: #{tpu_custom_call.1} parent=31 // pred_check_branch
          %323 = sbr.rel (%p321) target = $region56
        $region55: #{tpu_custom_call.1} parent=31 // pred_region
          %s325 = ssub.s32 128, 128
          %326 = vsyncadd %s317, %s325
          %s327 = smul.addr %s25, 128
          %s328 = scalar_lea.hbm %s3, %s327
          %s330 = sshll.u32 %s320, 4
          %s331 = int_to_ptr.vmem [resolvable:$true] %s330
          %333 = dma.vmem_to_hbm [thread:$0]  %s331, 128, %s328, %s317
        $region56: #{tpu_custom_call.1} parent=31 // pred_fallthru
          _
      $region32: #{tpu_custom_call.1} parent=5 // pred_fallthru
        _
      %p334 = scmp.le.s32.totalorder 2, %s16
      // Predicated region
      $region57: #{tpu_custom_call.1} parent=5 // pred_check
        %p335 = pneg %p334
      $region58: #{tpu_custom_call.1} parent=5 // pred_check_branch
        %337 = sbr.rel (%p335) target = $region60
      $region59: #{tpu_custom_call.1} parent=5 // pred_region
        %s338 = ssub.s32 %s16, 2
        // Predicated region
        $region61: #{tpu_custom_call.1} parent=59 // pred_check
          %p339 = pneg %p134
        $region62: #{tpu_custom_call.1} parent=59 // pred_check_branch
          %341 = sbr.rel (%p339) target = $region64
        $region63: #{tpu_custom_call.1} parent=59 // pred_region
          %s342 = sand.u32 %s119, 1
          %s343 = scalar_lea.sflag [#allocation5], %s342
          %s344 = sand.u32 %s119, 1
          %s345 = smul.addr %s344, 8
          %s346 = scalar_lea.vmem [#allocation9], %s345
          %347 = dma.done %s343, 128
        $region64: #{tpu_custom_call.1} parent=59 // pred_fallthru
          _
      $region60: #{tpu_custom_call.1} parent=5 // pred_fallthru
        _
    $region6: #{tpu_custom_call.1} parent=1 // loop_footer
      %s20 = sadd.s32 1, %s16
    $region7: #{tpu_custom_call.1} parent=1 // loop_footer_branch
      %15 = sbr.rel target = $region3
    $region8: #{tpu_custom_call.1} parent=1 // loop_exit
      _
    %348 = vsyncpa [#allocation4], 1
    %s349 = scalar_lea.sflag [#allocation4], 1
    %350 = vsyncpa %s349, 1
    %351 = vsyncpa [#allocation7], 1
    %s352 = scalar_lea.sflag [#allocation7], 1
    %353 = vsyncpa %s352, 1
    %354 = vsyncpa [#allocation5], 1
    %s355 = scalar_lea.sflag [#allocation5], 1
    %356 = vsyncpa %s355, 1

</llo_original>
